<compile_context>
chip_gen: v5e
topology: v5e:2x2
jax: 0.10.0
libtpu: 0.0.40
codegen_flags: <defaults>
</compile_context>

<pallas_src>
import jax
import jax.numpy as jnp
from jax.experimental import pallas as pl
from jax.experimental.pallas import tpu as pltpu


def _round_up(x, m):
    return (x + m - 1) // m * m


def _linear_relu_kernel(x_ref, w_ref, b_ref, o_ref):
    # Hot path: (tm, E) @ (E, C) on the MXU with f32 accumulate, bias add +
    # ReLU on the VPU, store the unpadded (tm, C) tile.
    y = jnp.dot(x_ref[...], w_ref[...], preferred_element_type=jnp.float32)
    y = y + b_ref[...]                       # (tm, C) + (1, C)
    o_ref[...] = jnp.maximum(y, 0.0).astype(o_ref.dtype)


def _choose_tm(M, E, C, x_itemsize, out_itemsize, tm_target, vmem_budget_bytes):
    """Pick the row-tile size: as large as tm_target, aligned for the dtype,
    and shrunk until double-buffered X/out tiles fit the VMEM budget."""
    align = 16 if x_itemsize == 2 else 8          # bf16 packs (16, 128)
    tm = max(align, min(_round_up(tm_target, align), _round_up(M, align)))
    resident = 2 * (E * C * x_itemsize + C * 4)   # W + bias (double-buffered, tiny)
    per_row = 2 * (E * x_itemsize + C * out_itemsize)   # X + out double-buffers
    while tm > align and resident + tm * per_row > vmem_budget_bytes:
        tm = max(align, _round_up(tm // 2, align))
    return tm


def gin_classifier_forward(embeds, weight, bias, *, tm_target=1024,
                           use_bf16=False, x_buffers=2,
                           vmem_budget_bytes=12 * 1024 * 1024):
    """embeds: (S, B, E); weight: (C, E); bias: (C,). Returns (B, S, C).

    use_bf16 halves the dominant X/W HBM read (mem-bound ~2x) but diverges
    from the f32 PyTorch reference by ~1e-3; keep False for exact parity.
    """
    S, B, E = embeds.shape
    C = weight.shape[0]
    M = S * B

    # --- layout plumbing (stays in JAX, all cheap) --------------------------
    # Natural flattening: row m = s*B + b holds embeds[s, b]; contiguous
    # reshape => no HBM copy of the activations.
    x = embeds.reshape(M, E)
    w = weight.T                        # (E, C), tiny; pre-transpose offline if hot
    b = bias.reshape(1, C)

    if use_bf16:
        x = x.astype(jnp.bfloat16)
        w = w.astype(jnp.bfloat16)

    x_item = jnp.dtype(x.dtype).itemsize
    out_dtype = embeds.dtype
    out_item = jnp.dtype(out_dtype).itemsize

    tm = _choose_tm(M, E, C, x_item, out_item, tm_target, vmem_budget_bytes)
    grid = (pl.cdiv(M, tm),)            # ragged trailing block: rows independent

    cost = pl.CostEstimate(
        flops=2 * M * E * C,
        transcendentals=0,
        bytes_accessed=x_item * (M * E + E * C) + 4 * C + out_item * M * C,
    )

    if x_buffers == 2:
        x_spec = pl.BlockSpec((tm, E), lambda i: (i, 0))
    else:  # v5e: deepen X buffering if profiling shows exposed DMA
        x_spec = pl.BlockSpec((tm, E), lambda i: (i, 0),
                              pipeline_mode=pl.Buffered(x_buffers))

    out = pl.pallas_call(
        _linear_relu_kernel,
        out_shape=jax.ShapeDtypeStruct((M, C), out_dtype),
        grid=grid,
        in_specs=[
            x_spec,                                    # X tile, pipelined
            pl.BlockSpec((E, C), lambda i: (0, 0)),    # W resident across steps
            pl.BlockSpec((1, C), lambda i: (0, 0)),    # bias resident
        ],
        out_specs=pl.BlockSpec((tm, C), lambda i: (i, 0)),
        compiler_params=pltpu.CompilerParams(
            dimension_semantics=("parallel",)),        # megacore / 2-TC sharding
        cost_estimate=cost,
    )(x, w, b)

    # Output-side axis swap implementing torch.swapaxes(embeds, 1, 0); with
    # the unpadded C-wide output this touches only M*C elements.
    return jnp.swapaxes(out.reshape(S, B, C), 1, 0)


def init_params(key, emb_size, num_classes):
    """Deterministic init mirroring the module: xavier_uniform_ on the 2-D
    weight; bias keeps PyTorch Linear's default uniform(-1/sqrt(fan_in), ...)."""
    kw, kb = jax.random.split(key)
    bound_w = (6.0 / (emb_size + num_classes)) ** 0.5
    weight = jax.random.uniform(
        kw, (num_classes, emb_size), jnp.float32, -bound_w, bound_w)
    bound_b = 1.0 / (emb_size ** 0.5)
    bias = jax.random.uniform(
        kb, (num_classes,), jnp.float32, -bound_b, bound_b)
    return weight, bias


if __name__ == "__main__":
    key = jax.random.PRNGKey(0)
    k_x, k_p = jax.random.split(key)

    # Small shapes implied by the forward: (seq, batch, emb_size).
    S, B, E, C = 8, 2, 32, 4
    embeds = jax.random.normal(k_x, (S, B, E), jnp.float32)
    weight, bias = init_params(k_p, E, C)

    out = gin_classifier_forward(embeds, weight, bias)
    jax.block_until_ready(out)

    # Sanity check against plain-JAX reference of the same math.
    ref = jnp.maximum(jnp.swapaxes(embeds, 1, 0) @ weight.T + bias, 0.0)
    assert out.shape == (B, S, C)
    assert jnp.allclose(out, ref, atol=1e-5, rtol=1e-5)

    print("KERNEL_OK")
</pallas_src>

<mosaic_0001>
module attributes {stable_mosaic.version = 11 : i64} {
  func.func @_linear_relu_kernel(%arg0: i32, %arg1: memref<16x32xf32, #tpu.memory_space<vmem>>, %arg2: memref<32x4xf32, #tpu.memory_space<vmem>>, %arg3: memref<1x4xf32, #tpu.memory_space<vmem>>, %arg4: memref<16x4xf32, #tpu.memory_space<vmem>>) attributes {dimension_semantics = [#tpu.dimension_semantics<parallel>], iteration_bounds = array<i64: 1>, scalar_prefetch = 0 : i64, scratch_operands = 0 : i64, tpu.core_type = #tpu.core_type<tc>, window_params = [{transform_indices = @transform_0, window_bounds = array<i64: 16, 32>}, {pipeline_mode = #tpu.pipeline_mode<synchronous>, transform_indices = @transform_1, window_bounds = array<i64: 32, 4>}, {pipeline_mode = #tpu.pipeline_mode<synchronous>, transform_indices = @transform_2, window_bounds = array<i64: 1, 4>}, {transform_indices = @transform_3, window_bounds = array<i64: 16, 4>}]} {
    %c0 = arith.constant 0 : index
    %c0_0 = arith.constant 0 : index
    %0 = vector.load %arg1[%c0, %c0_0] : memref<16x32xf32, #tpu.memory_space<vmem>>, vector<16x32xf32>
    %c0_1 = arith.constant 0 : index
    %c0_2 = arith.constant 0 : index
    %1 = vector.load %arg2[%c0_1, %c0_2] : memref<32x4xf32, #tpu.memory_space<vmem>>, vector<32x4xf32>
    %cst = arith.constant dense<0.000000e+00> : vector<16x4xf32>
    %2 = tpu.matmul %0, %1, %cst {dimension_numbers = #tpu.dot_dimension_numbers<[1], [0], [0], [1], [0, 0, 1, 1], [], []>} : vector<16x32xf32>, vector<32x4xf32>, vector<16x4xf32> -> vector<16x4xf32>
    %c0_3 = arith.constant 0 : index
    %c0_4 = arith.constant 0 : index
    %3 = vector.load %arg3[%c0_3, %c0_4] : memref<1x4xf32, #tpu.memory_space<vmem>>, vector<1x4xf32>
    %4 = vector.broadcast %3 : vector<1x4xf32> to vector<16x4xf32>
    %5 = arith.addf %2, %4 : vector<16x4xf32>
    %cst_5 = arith.constant 0.000000e+00 : f32
    %6 = vector.broadcast %cst_5 : f32 to vector<16x4xf32>
    %7 = arith.maximumf %5, %6 : vector<16x4xf32>
    %c0_6 = arith.constant 0 : index
    %c0_7 = arith.constant 0 : index
    %8 = vector.load %arg4[%c0_6, %c0_7] : memref<16x4xf32, #tpu.memory_space<vmem>>, vector<16x4xf32>
    tpu.vector_store %arg4[%c0_6, %c0_7], %7 {strides = array<i32>} : memref<16x4xf32, #tpu.memory_space<vmem>>, vector<16x4xf32>,
    return
  }
  func.func @transform_0(%arg0: i32) -> (i32, i32) {
    %c0_i32 = arith.constant 0 : i32
    %c0_i32_0 = arith.constant 0 : i32
    return %arg0, %c0_i32 : i32, i32
  }
  func.func @transform_1(%arg0: i32) -> (i32, i32) {
    %c0_i32 = arith.constant 0 : i32
    %c0_i32_0 = arith.constant 0 : i32
    %c0_i32_1 = arith.constant 0 : i32
    return %c0_i32, %c0_i32_0 : i32, i32
  }
  func.func @transform_2(%arg0: i32) -> (i32, i32) {
    %c0_i32 = arith.constant 0 : i32
    %c0_i32_0 = arith.constant 0 : i32
    %c0_i32_1 = arith.constant 0 : i32
    return %c0_i32, %c0_i32_0 : i32, i32
  }
  func.func @transform_3(%arg0: i32) -> (i32, i32) {
    %c0_i32 = arith.constant 0 : i32
    %c0_i32_0 = arith.constant 0 : i32
    return %arg0, %c0_i32 : i32, i32
  }
}

</mosaic_0001>

<llo_original>
// kernel: tpu_custom_call.1
$region0: #{tpu_custom_call.1}
  #allocation0 [shape = 'u32[]', space=smem, size = 0x4, offset = 0x4, fixed_abs, tag = 'smem constant byte address 0x4 - core index']
  #allocation1 [shape = 'u32[72,128]{1,0:T(1,128)}', space=vmem, size = 0x9000, scoped, tag = 'internal scratch']
  %s0 = inlined_call_operand.vmem [shape: f32[16,32], index: 0, kind: input, shape index: {}]
  %s1 = inlined_call_operand.vmem [shape: f32[32,4], index: 1, kind: input, shape index: {}]
  %s2 = inlined_call_operand.vmem [shape: f32[1,4], index: 2, kind: input, shape index: {}]
  %s3 = inlined_call_operand.vmem [shape: f32[16,4], index: 3, kind: output, shape index: {}]
  %s4 = sld [smem:[#allocation0]]
  $region22: #{tpu_custom_call.1} parent=0
    _
  %s6 = ssub.s32 1, %s4
  %s7 = scalar_select 0, %s6, %s4
  // Predicated region
  $region2: #{tpu_custom_call.1} parent=0 // pred_check
    _
  $region3: #{tpu_custom_call.1} parent=0 // pred_check_branch
    %9 = sbr.rel (0) target = $region5
  $region4: #{tpu_custom_call.1} parent=0 // pred_region
    _
  $region5: #{tpu_custom_call.1} parent=0 // pred_fallthru
    _
  // Predicated region
  $region6: #{tpu_custom_call.1} parent=0 // pred_check
    _
  $region7: #{tpu_custom_call.1} parent=0 // pred_check_branch
    %11 = sbr.rel (0) target = $region9
  $region8: #{tpu_custom_call.1} parent=0 // pred_region
    _
  $region9: #{tpu_custom_call.1} parent=0 // pred_fallthru
    _
  // Predicated region
  $region10: #{tpu_custom_call.1} parent=0 // pred_check
    _
  $region11: #{tpu_custom_call.1} parent=0 // pred_check_branch
    %13 = sbr.rel (0) target = $region13
  $region12: #{tpu_custom_call.1} parent=0 // pred_region
    _
  $region13: #{tpu_custom_call.1} parent=0 // pred_fallthru
    _
  %v14 = vld [vmem:[%s0] sm:$0xff]
  %v15 = vld [vmem:[%s0 + $0x8] sm:$0xff]
  %v16 = vld [vmem:[%s1] sm:$0xff]
  %v17 = vld [vmem:[%s1 + $0x8] sm:$0xff]
  %v18 = vld [vmem:[%s1 + $0x10] sm:$0xff]
  %v19 = vld [vmem:[%s1 + $0x18] sm:$0xff]
  %v20 = vld [vmem:[%s2] sm:$0x1]
  %v22 = vperm.slane %v20, 0
  %vm24 = vcmask 261120
  %v26 = vsel %vm24, %v14, 0
  %v29 = vsel %vm24, %v15, 0
  %31 = vmatpush.msra.mxu0 0.0
  %32 = vmatpush.msra.mxu0 0.0
  %33 = vmatpush.msra.mxu0 0.0
  %34 = vmatpush.msra.mxu0 0.0
  %35 = vmatpush.msra.mxu0 0.0
  %36 = vmatpush.msra.mxu0 0.0
  %37 = vmatpush.msra.mxu0 0.0
  %38 = vmatpush.msra.mxu0 0.0
  %39 = vmatpush.msra.mxu0 0.0
  %40 = vmatpush.msra.mxu0 0.0
  %41 = vmatpush.msra.mxu0 0.0
  %42 = vmatpush.msra.mxu0 0.0
  %43 = vmatpush.msra.mxu0 %v19
  %44 = vmatpush.msra.mxu0 %v18
  %45 = vmatpush.msra.mxu0 %v17
  %46 = vmatpush.msra.mxu0 %v16
  %47 = vmatmul.f32.gmra.mxu0 %v26
  %v48 = vpop.f32.mrf.mxu0
  %v49 = vadd.f32 %v22, %v48
  %50 = vmatmul.f32.gmra.mxu0 %v29
  %v51 = vpop.f32.mrf.mxu0
  %v52 = vadd.f32 %v22, %v51
  %53 = vdwg.mxu0
  %v54 = vmax.f32 %v49, 0.0
  %v55 = vmax.f32 %v52, 0.0
  %vm56 = vcmask 31744
  %57 = vst.msk [vmem:[%s3] sm:$0xff] %vm56, %v54
  %58 = vst.msk [vmem:[%s3 + $0x8] sm:$0xff] %vm56, %v55
  // Predicated region
  $region14: #{tpu_custom_call.1} parent=0 // pred_check
    _
  $region15: #{tpu_custom_call.1} parent=0 // pred_check_branch
    %60 = sbr.rel (0) target = $region17
  $region16: #{tpu_custom_call.1} parent=0 // pred_region
    _
  $region17: #{tpu_custom_call.1} parent=0 // pred_fallthru
    _
  // Predicated region
  $region18: #{tpu_custom_call.1} parent=0 // pred_check
    _
  $region19: #{tpu_custom_call.1} parent=0 // pred_check_branch
    %62 = sbr.rel (0) target = $region21
  $region20: #{tpu_custom_call.1} parent=0 // pred_region
    _
  $region21: #{tpu_custom_call.1} parent=0 // pred_fallthru
    _

</llo_original>
